<compile_context>
chip_gen: v6e
topology: v6e:2x2x1
jax: 0.10.0
libtpu: 0.0.40
codegen_flags: <defaults>
</compile_context>

<pallas_src>
import functools

import jax
import jax.numpy as jnp
from jax.experimental import pallas as pl
from jax.experimental.pallas import tpu as pltpu


def _mbconv_fused_kernel(x_ref, mask_ref, we_ref, be_ref, wd_ref, bd_ref,
                         wse1_ref, bse1_ref, wse2_ref, bse2_ref,
                         wp_ref, bp_ref, o_ref, *, H, W, use_residual):
    """One batch image per grid step; activations laid out as (channels, H*W)."""
    HW = H * W
    Ce = we_ref.shape[0]

    x = x_ref[0]                                                    # (Cin, HW) f32

    # ---- 1x1 expansion conv (bf16 MXU, f32 accumulate) + bias + ReLU6 ----------
    e = jnp.dot(we_ref[...], x.astype(jnp.bfloat16),
                preferred_element_type=jnp.float32)                 # (Ce, HW)
    e = jnp.clip(e + be_ref[...], 0.0, 6.0)

    # ---- 3x3 depthwise conv, stride 1, zero pad 1 + bias + ReLU6 ---------------
    # Tap (dy,dx) reads pixel (h+dy, w+dx): a lane rotation of the flat h*W+w axis
    # by dy*W+dx, zeroed at the image border by precomputed 0/1 masks (this
    # reproduces PyTorch's pad-after-expansion zero padding exactly).
    masks = mask_ref[...]                                           # (4, HW) f32
    top, bot = masks[0:1, :], masks[1:2, :]                         # h>=1 , h<=H-2
    left, right = masks[2:3, :], masks[3:4, :]                      # w>=1 , w<=W-2
    wd = wd_ref[...]                                                # (Ce, 9) f32

    acc = jnp.zeros((Ce, HW), jnp.float32)
    k = 0
    for dy in (-1, 0, 1):
        for dx in (-1, 0, 1):
            shift = dy * W + dx
            tap = e if shift == 0 else pltpu.roll(e, shift=(-shift) % HW, axis=1)
            if dy == -1:
                tap = tap * top
            elif dy == 1:
                tap = tap * bot
            if dx == -1:
                tap = tap * left
            elif dx == 1:
                tap = tap * right
            acc = acc + tap * wd[:, k:k + 1]                        # per-channel tap
            k += 1
    y = jnp.clip(acc + bd_ref[...], 0.0, 6.0)                       # (Ce, HW)

    # ---- squeeze-excite gate (tiny FCs, computed once per image) ----------------
    pooled = jnp.mean(y, axis=1, keepdims=True)                     # (Ce, 1)
    h = jnp.dot(wse1_ref[...], pooled.astype(jnp.bfloat16),
                preferred_element_type=jnp.float32) + bse1_ref[...]
    h = jnp.maximum(h, 0.0)                                         # (Cse, 1)
    s = jnp.dot(wse2_ref[...], h.astype(jnp.bfloat16),
                preferred_element_type=jnp.float32) + bse2_ref[...]
    s = jax.nn.sigmoid(s)                                           # (Ce, 1)

    # ---- 1x1 projection (bf16 MXU) + bias + residual; lane-dense (Cout, HW) -----
    yg = (y * s).astype(jnp.bfloat16)
    out = jnp.dot(wp_ref[...], yg, preferred_element_type=jnp.float32)
    out = out + bp_ref[...]
    if use_residual:
        out = out + x
    o_ref[0] = out                                                  # unmasked stores


@functools.partial(jax.jit, static_argnames=("use_residual",))
def base_op_forward(x_nchw, params, use_residual=True):
    x = x_nchw.astype(jnp.float32)
    N, Cin, H, W = x.shape
    HW = H * W
    Ce = params["w_exp"].shape[1]
    Cse = params["w_se1"].shape[1]
    Cout = params["w_pw"].shape[1]

    # (C, H*W) lane-dense layout == flattened NCHW: no transposes at either end.
    x_flat = x.reshape(N, Cin, HW)

    # per-tap boundary masks (tap (dy,dx) is valid where h+dy / w+dx stays in-image)
    hh = jnp.arange(HW, dtype=jnp.int32) // W
    ww = jnp.arange(HW, dtype=jnp.int32) % W
    edge_masks = jnp.stack(
        [(hh >= 1).astype(jnp.float32),          # dy == -1
         (hh <= H - 2).astype(jnp.float32),      # dy == +1
         (ww >= 1).astype(jnp.float32),          # dx == -1
         (ww <= W - 2).astype(jnp.float32)],     # dx == +1
        axis=0)                                  # (4, HW)

    # weights pre-transposed to the (out_rows, in_cols) orientation of the
    # (C, H*W) layout; MXU operands bf16 (f32 accumulation), epilogues f32.
    we = params["w_exp"].T.astype(jnp.bfloat16)       # (Ce, Cin)
    be = params["b_exp"].reshape(-1, 1)               # (Ce, 1)
    wd = params["w_dw"].T.astype(jnp.float32)         # (Ce, 9)
    bd = params["b_dw"].reshape(-1, 1)                # (Ce, 1)
    wse1 = params["w_se1"].T.astype(jnp.bfloat16)     # (Cse, Ce)
    bse1 = params["b_se1"].reshape(-1, 1)             # (Cse, 1)
    wse2 = params["w_se2"].T.astype(jnp.bfloat16)     # (Ce, Cse)
    bse2 = params["b_se2"].reshape(-1, 1)             # (Ce, 1)
    wp = params["w_pw"].T.astype(jnp.bfloat16)        # (Cout, Ce)
    bp = params["b_pw"].reshape(-1, 1)                # (Cout, 1)

    kernel = functools.partial(_mbconv_fused_kernel, H=H, W=W,
                               use_residual=use_residual)
    const = lambda n: (0, 0)

    out = pl.pallas_call(
        kernel,
        out_shape=jax.ShapeDtypeStruct((N, Cout, HW), jnp.float32),
        grid=(N,),
        in_specs=[
            pl.BlockSpec((1, Cin, HW), lambda n: (n, 0, 0)),
            pl.BlockSpec((4, HW), const),
            pl.BlockSpec((Ce, Cin), const),
            pl.BlockSpec((Ce, 1), const),
            pl.BlockSpec((Ce, 9), const),
            pl.BlockSpec((Ce, 1), const),
            pl.BlockSpec((Cse, Ce), const),
            pl.BlockSpec((Cse, 1), const),
            pl.BlockSpec((Ce, Cse), const),
            pl.BlockSpec((Ce, 1), const),
            pl.BlockSpec((Cout, Ce), const),
            pl.BlockSpec((Cout, 1), const),
        ],
        out_specs=pl.BlockSpec((1, Cout, HW), lambda n: (n, 0, 0)),
        compiler_params=pltpu.CompilerParams(
            dimension_semantics=("parallel",),          # megacore / v7x 2-TC sharding
            vmem_limit_bytes=32 * 1024 * 1024),
    )(x_flat, edge_masks, we, be, wd, bd, wse1, bse1, wse2, bse2, wp, bp)

    return out.reshape(N, Cout, H, W)


# ---------------------------------------------------------------------------
# Pure-JAX reference (same bf16 matmul-operand rounding for a tight comparison).
# ---------------------------------------------------------------------------
def ref_forward(x_nchw, params, use_residual=True):
    x = jnp.transpose(x_nchw, (0, 2, 3, 1)).astype(jnp.float32)   # NHWC
    N, H, W, Cin = x.shape
    we = params["w_exp"].astype(jnp.bfloat16)
    wp = params["w_pw"].astype(jnp.bfloat16)
    wse1 = params["w_se1"].astype(jnp.bfloat16)
    wse2 = params["w_se2"].astype(jnp.bfloat16)

    y = jnp.einsum("nhwc,cd->nhwd", x.astype(jnp.bfloat16), we,
                   preferred_element_type=jnp.float32) + params["b_exp"]
    y = jnp.clip(y, 0.0, 6.0)

    ypad = jnp.pad(y, ((0, 0), (1, 1), (1, 1), (0, 0)))
    acc = jnp.zeros_like(y)
    for ky in range(3):
        for kx in range(3):
            acc = acc + ypad[:, ky:ky + H, kx:kx + W, :] * params["w_dw"][ky * 3 + kx]
    y = jnp.clip(acc + params["b_dw"], 0.0, 6.0)

    pooled = y.mean(axis=(1, 2))                                   # (N, Ce)
    h = jnp.einsum("nc,cd->nd", pooled.astype(jnp.bfloat16), wse1,
                   preferred_element_type=jnp.float32) + params["b_se1"]
    h = jnp.maximum(h, 0.0)
    s = jax.nn.sigmoid(jnp.einsum("nc,cd->nd", h.astype(jnp.bfloat16), wse2,
                                  preferred_element_type=jnp.float32) + params["b_se2"])
    y = y * s[:, None, None, :]

    out = jnp.einsum("nhwc,cd->nhwd", y.astype(jnp.bfloat16), wp,
                     preferred_element_type=jnp.float32) + params["b_pw"]
    if use_residual:
        out = out + x
    return jnp.transpose(out, (0, 3, 1, 2))


def make_params(key, in_channels, out_channels, expansion_ratio, se_ratio):
    Ce = in_channels * expansion_ratio
    Cse = max(1, int(Ce * se_ratio))
    ks = jax.random.split(key, 8)
    return {
        "w_exp": jax.random.normal(ks[0], (in_channels, Ce), jnp.float32) * 0.2,
        "b_exp": jax.random.normal(ks[1], (1, Ce), jnp.float32) * 0.05,
        "w_dw":  jax.random.normal(ks[2], (9, Ce), jnp.float32) * 0.2,
        "b_dw":  jax.random.normal(ks[3], (1, Ce), jnp.float32) * 0.05,
        "w_se1": jax.random.normal(ks[4], (Ce, Cse), jnp.float32) * 0.2,
        "b_se1": jnp.zeros((1, Cse), jnp.float32),
        "w_se2": jax.random.normal(ks[5], (Cse, Ce), jnp.float32) * 0.2,
        "b_se2": jnp.zeros((1, Ce), jnp.float32),
        "w_pw":  jax.random.normal(ks[6], (Ce, out_channels), jnp.float32) * 0.2,
        "b_pw":  jax.random.normal(ks[7], (1, out_channels), jnp.float32) * 0.05,
    }


if __name__ == "__main__":
    # batch=2, in=out=4 channels, 16x16 spatial, expansion_ratio=4, se_ratio=0.25,
    # stride=1, skip=True -> use_residual=True.
    key = jax.random.PRNGKey(0)
    kx, kp = jax.random.split(key)
    N, Cin, H, W = 2, 4, 16, 16
    expansion_ratio, se_ratio = 4, 0.25
    x = jax.random.normal(kx, (N, Cin, H, W), jnp.float32)
    params = make_params(kp, Cin, Cin, expansion_ratio, se_ratio)

    out = jax.block_until_ready(base_op_forward(x, params))
    ref = jax.block_until_ready(ref_forward(x, params))

    assert out.shape == (N, Cin, H, W)
    max_err = float(jnp.max(jnp.abs(out - ref)))
    # Both implementations use identical bf16 MXU-operand rounding; residual
    # differences come only from the global-average-pool reduction order, which can
    # flip a handful of bf16 roundings of the SE-scaled activation by 1 ulp.
    # The tolerance sits well above that and far below any real bug (a wrong tap,
    # mask or residual produces errors >> 0.1).
    assert jnp.allclose(out, ref, atol=2e-2, rtol=2e-2), \
        f"mismatch vs reference, max_err={max_err}"

    print("KERNEL_OK")
</pallas_src>

<mosaic_0001>
module attributes {stable_mosaic.version = 11 : i64} {
  func.func @_mbconv_fused_kernel(%arg0: i32, %arg1: memref<1x4x256xf32, #tpu.memory_space<vmem>>, %arg2: memref<4x256xf32, #tpu.memory_space<vmem>>, %arg3: memref<16x4xbf16, #tpu.memory_space<vmem>>, %arg4: memref<16x1xf32, #tpu.memory_space<vmem>>, %arg5: memref<16x9xf32, #tpu.memory_space<vmem>>, %arg6: memref<16x1xf32, #tpu.memory_space<vmem>>, %arg7: memref<4x16xbf16, #tpu.memory_space<vmem>>, %arg8: memref<4x1xf32, #tpu.memory_space<vmem>>, %arg9: memref<16x4xbf16, #tpu.memory_space<vmem>>, %arg10: memref<16x1xf32, #tpu.memory_space<vmem>>, %arg11: memref<4x16xbf16, #tpu.memory_space<vmem>>, %arg12: memref<4x1xf32, #tpu.memory_space<vmem>>, %arg13: memref<1x4x256xf32, #tpu.memory_space<vmem>>) attributes {dimension_semantics = [#tpu.dimension_semantics<parallel>], iteration_bounds = array<i64: 2>, scalar_prefetch = 0 : i64, scratch_operands = 0 : i64, tpu.core_type = #tpu.core_type<tc>, window_params = [{transform_indices = @transform_0, window_bounds = array<i64: 1, 4, 256>}, {pipeline_mode = #tpu.pipeline_mode<synchronous>, transform_indices = @transform_1, window_bounds = array<i64: 4, 256>}, {pipeline_mode = #tpu.pipeline_mode<synchronous>, transform_indices = @transform_2, window_bounds = array<i64: 16, 4>}, {pipeline_mode = #tpu.pipeline_mode<synchronous>, transform_indices = @transform_3, window_bounds = array<i64: 16, 1>}, {pipeline_mode = #tpu.pipeline_mode<synchronous>, transform_indices = @transform_4, window_bounds = array<i64: 16, 9>}, {pipeline_mode = #tpu.pipeline_mode<synchronous>, transform_indices = @transform_5, window_bounds = array<i64: 16, 1>}, {pipeline_mode = #tpu.pipeline_mode<synchronous>, transform_indices = @transform_6, window_bounds = array<i64: 4, 16>}, {pipeline_mode = #tpu.pipeline_mode<synchronous>, transform_indices = @transform_7, window_bounds = array<i64: 4, 1>}, {pipeline_mode = #tpu.pipeline_mode<synchronous>, transform_indices = @transform_8, window_bounds = array<i64: 16, 4>}, {pipeline_mode = #tpu.pipeline_mode<synchronous>, transform_indices = @transform_9, window_bounds = array<i64: 16, 1>}, {pipeline_mode = #tpu.pipeline_mode<synchronous>, transform_indices = @transform_10, window_bounds = array<i64: 4, 16>}, {pipeline_mode = #tpu.pipeline_mode<synchronous>, transform_indices = @transform_11, window_bounds = array<i64: 4, 1>}, {transform_indices = @transform_12, window_bounds = array<i64: 1, 4, 256>}]} {
    %c0 = arith.constant 0 : index
    %c0_0 = arith.constant 0 : index
    %c0_1 = arith.constant 0 : index
    %0 = vector.load %arg1[%c0, %c0_0, %c0_1] : memref<1x4x256xf32, #tpu.memory_space<vmem>>, vector<1x4x256xf32>
    %1 = vector.shape_cast %0 : vector<1x4x256xf32> to vector<4x256xf32>
    %c0_2 = arith.constant 0 : index
    %c0_3 = arith.constant 0 : index
    %2 = vector.load %arg3[%c0_2, %c0_3] : memref<16x4xbf16, #tpu.memory_space<vmem>>, vector<16x4xbf16>
    %3 = arith.truncf %1 : vector<4x256xf32> to vector<4x256xbf16>
    %cst = arith.constant dense<0.000000e+00> : vector<16x256xf32>
    %4 = tpu.matmul %2, %3, %cst {dimension_numbers = #tpu.dot_dimension_numbers<[1], [0], [0], [1], [0, 0, 1, 1], [], []>} : vector<16x4xbf16>, vector<4x256xbf16>, vector<16x256xf32> -> vector<16x256xf32>
    %c0_4 = arith.constant 0 : index
    %c0_5 = arith.constant 0 : index
    %5 = vector.load %arg4[%c0_4, %c0_5] : memref<16x1xf32, #tpu.memory_space<vmem>>, vector<16x1xf32>
    %6 = vector.broadcast %5 : vector<16x1xf32> to vector<16x256xf32>
    %7 = arith.addf %4, %6 : vector<16x256xf32>
    %cst_6 = arith.constant 0.000000e+00 : f32
    %cst_7 = arith.constant 6.000000e+00 : f32
    %8 = vector.broadcast %cst_6 : f32 to vector<16x256xf32>
    %9 = arith.maximumf %8, %7 : vector<16x256xf32>
    %10 = vector.broadcast %cst_7 : f32 to vector<16x256xf32>
    %11 = arith.minimumf %10, %9 : vector<16x256xf32>
    %c0_8 = arith.constant 0 : index
    %c0_9 = arith.constant 0 : index
    %12 = vector.load %arg2[%c0_8, %c0_9] : memref<4x256xf32, #tpu.memory_space<vmem>>, vector<4x256xf32>
    %13 = vector.extract_strided_slice %12 {offsets = [0, 0], sizes = [1, 256], strides = [1, 1]} : vector<4x256xf32> to vector<1x256xf32>
    %14 = vector.extract_strided_slice %12 {offsets = [1, 0], sizes = [1, 256], strides = [1, 1]} : vector<4x256xf32> to vector<1x256xf32>
    %15 = vector.extract_strided_slice %12 {offsets = [2, 0], sizes = [1, 256], strides = [1, 1]} : vector<4x256xf32> to vector<1x256xf32>
    %16 = vector.extract_strided_slice %12 {offsets = [3, 0], sizes = [1, 256], strides = [1, 1]} : vector<4x256xf32> to vector<1x256xf32>
    %c0_10 = arith.constant 0 : index
    %c0_11 = arith.constant 0 : index
    %17 = vector.load %arg5[%c0_10, %c0_11] : memref<16x9xf32, #tpu.memory_space<vmem>>, vector<16x9xf32>
    %cst_12 = arith.constant 0.000000e+00 : f32
    %18 = vector.broadcast %cst_12 : f32 to vector<16x256xf32>
    %c17_i32 = arith.constant 17 : i32
    %19 = tpu.dynamic_rotate %11 by %c17_i32 dim 1 : vector<16x256xf32>, i32 -> vector<16x256xf32>
    %20 = vector.broadcast %13 : vector<1x256xf32> to vector<16x256xf32>
    %21 = arith.mulf %19, %20 : vector<16x256xf32>
    %22 = vector.broadcast %15 : vector<1x256xf32> to vector<16x256xf32>
    %23 = arith.mulf %21, %22 : vector<16x256xf32>
    %24 = vector.extract_strided_slice %17 {offsets = [0, 0], sizes = [16, 1], strides = [1, 1]} : vector<16x9xf32> to vector<16x1xf32>
    %25 = vector.broadcast %24 : vector<16x1xf32> to vector<16x256xf32>
    %26 = arith.mulf %23, %25 : vector<16x256xf32>
    %27 = arith.addf %18, %26 : vector<16x256xf32>
    %c16_i32 = arith.constant 16 : i32
    %28 = tpu.dynamic_rotate %11 by %c16_i32 dim 1 : vector<16x256xf32>, i32 -> vector<16x256xf32>
    %29 = vector.broadcast %13 : vector<1x256xf32> to vector<16x256xf32>
    %30 = arith.mulf %28, %29 : vector<16x256xf32>
    %31 = vector.extract_strided_slice %17 {offsets = [0, 1], sizes = [16, 1], strides = [1, 1]} : vector<16x9xf32> to vector<16x1xf32>
    %32 = vector.broadcast %31 : vector<16x1xf32> to vector<16x256xf32>
    %33 = arith.mulf %30, %32 : vector<16x256xf32>
    %34 = arith.addf %27, %33 : vector<16x256xf32>
    %c15_i32 = arith.constant 15 : i32
    %35 = tpu.dynamic_rotate %11 by %c15_i32 dim 1 : vector<16x256xf32>, i32 -> vector<16x256xf32>
    %36 = vector.broadcast %13 : vector<1x256xf32> to vector<16x256xf32>
    %37 = arith.mulf %35, %36 : vector<16x256xf32>
    %38 = vector.broadcast %16 : vector<1x256xf32> to vector<16x256xf32>
    %39 = arith.mulf %37, %38 : vector<16x256xf32>
    %40 = vector.extract_strided_slice %17 {offsets = [0, 2], sizes = [16, 1], strides = [1, 1]} : vector<16x9xf32> to vector<16x1xf32>
    %41 = vector.broadcast %40 : vector<16x1xf32> to vector<16x256xf32>
    %42 = arith.mulf %39, %41 : vector<16x256xf32>
    %43 = arith.addf %34, %42 : vector<16x256xf32>
    %c1_i32 = arith.constant 1 : i32
    %44 = tpu.dynamic_rotate %11 by %c1_i32 dim 1 : vector<16x256xf32>, i32 -> vector<16x256xf32>
    %45 = vector.broadcast %15 : vector<1x256xf32> to vector<16x256xf32>
    %46 = arith.mulf %44, %45 : vector<16x256xf32>
    %47 = vector.extract_strided_slice %17 {offsets = [0, 3], sizes = [16, 1], strides = [1, 1]} : vector<16x9xf32> to vector<16x1xf32>
    %48 = vector.broadcast %47 : vector<16x1xf32> to vector<16x256xf32>
    %49 = arith.mulf %46, %48 : vector<16x256xf32>
    %50 = arith.addf %43, %49 : vector<16x256xf32>
    %51 = vector.extract_strided_slice %17 {offsets = [0, 4], sizes = [16, 1], strides = [1, 1]} : vector<16x9xf32> to vector<16x1xf32>
    %52 = vector.broadcast %51 : vector<16x1xf32> to vector<16x256xf32>
    %53 = arith.mulf %11, %52 : vector<16x256xf32>
    %54 = arith.addf %50, %53 : vector<16x256xf32>
    %c255_i32 = arith.constant 255 : i32
    %55 = tpu.dynamic_rotate %11 by %c255_i32 dim 1 : vector<16x256xf32>, i32 -> vector<16x256xf32>
    %56 = vector.broadcast %16 : vector<1x256xf32> to vector<16x256xf32>
    %57 = arith.mulf %55, %56 : vector<16x256xf32>
    %58 = vector.extract_strided_slice %17 {offsets = [0, 5], sizes = [16, 1], strides = [1, 1]} : vector<16x9xf32> to vector<16x1xf32>
    %59 = vector.broadcast %58 : vector<16x1xf32> to vector<16x256xf32>
    %60 = arith.mulf %57, %59 : vector<16x256xf32>
    %61 = arith.addf %54, %60 : vector<16x256xf32>
    %c241_i32 = arith.constant 241 : i32
    %62 = tpu.dynamic_rotate %11 by %c241_i32 dim 1 : vector<16x256xf32>, i32 -> vector<16x256xf32>
    %63 = vector.broadcast %14 : vector<1x256xf32> to vector<16x256xf32>
    %64 = arith.mulf %62, %63 : vector<16x256xf32>
    %65 = vector.broadcast %15 : vector<1x256xf32> to vector<16x256xf32>
    %66 = arith.mulf %64, %65 : vector<16x256xf32>
    %67 = vector.extract_strided_slice %17 {offsets = [0, 6], sizes = [16, 1], strides = [1, 1]} : vector<16x9xf32> to vector<16x1xf32>
    %68 = vector.broadcast %67 : vector<16x1xf32> to vector<16x256xf32>
    %69 = arith.mulf %66, %68 : vector<16x256xf32>
    %70 = arith.addf %61, %69 : vector<16x256xf32>
    %c240_i32 = arith.constant 240 : i32
    %71 = tpu.dynamic_rotate %11 by %c240_i32 dim 1 : vector<16x256xf32>, i32 -> vector<16x256xf32>
    %72 = vector.broadcast %14 : vector<1x256xf32> to vector<16x256xf32>
    %73 = arith.mulf %71, %72 : vector<16x256xf32>
    %74 = vector.extract_strided_slice %17 {offsets = [0, 7], sizes = [16, 1], strides = [1, 1]} : vector<16x9xf32> to vector<16x1xf32>
    %75 = vector.broadcast %74 : vector<16x1xf32> to vector<16x256xf32>
    %76 = arith.mulf %73, %75 : vector<16x256xf32>
    %77 = arith.addf %70, %76 : vector<16x256xf32>
    %c239_i32 = arith.constant 239 : i32
    %78 = tpu.dynamic_rotate %11 by %c239_i32 dim 1 : vector<16x256xf32>, i32 -> vector<16x256xf32>
    %79 = vector.broadcast %14 : vector<1x256xf32> to vector<16x256xf32>
    %80 = arith.mulf %78, %79 : vector<16x256xf32>
    %81 = vector.broadcast %16 : vector<1x256xf32> to vector<16x256xf32>
    %82 = arith.mulf %80, %81 : vector<16x256xf32>
    %83 = vector.extract_strided_slice %17 {offsets = [0, 8], sizes = [16, 1], strides = [1, 1]} : vector<16x9xf32> to vector<16x1xf32>
    %84 = vector.broadcast %83 : vector<16x1xf32> to vector<16x256xf32>
    %85 = arith.mulf %82, %84 : vector<16x256xf32>
    %86 = arith.addf %77, %85 : vector<16x256xf32>
    %c0_13 = arith.constant 0 : index
    %c0_14 = arith.constant 0 : index
    %87 = vector.load %arg6[%c0_13, %c0_14] : memref<16x1xf32, #tpu.memory_space<vmem>>, vector<16x1xf32>
    %88 = vector.broadcast %87 : vector<16x1xf32> to vector<16x256xf32>
    %89 = arith.addf %86, %88 : vector<16x256xf32>
    %cst_15 = arith.constant 0.000000e+00 : f32
    %cst_16 = arith.constant 6.000000e+00 : f32
    %90 = vector.broadcast %cst_15 : f32 to vector<16x256xf32>
    %91 = arith.maximumf %90, %89 : vector<16x256xf32>
    %92 = vector.broadcast %cst_16 : f32 to vector<16x256xf32>
    %93 = arith.minimumf %92, %91 : vector<16x256xf32>
    %cst_17 = arith.constant dense<0.000000e+00> : vector<16xf32>
    %94 = vector.multi_reduction <add>, %93, %cst_17 [1] : vector<16x256xf32> to vector<16xf32>
    %95 = vector.shape_cast %94 : vector<16xf32> to vector<16x1xf32>
    %cst_18 = arith.constant 2.560000e+02 : f32
    %96 = vector.broadcast %cst_18 : f32 to vector<16x1xf32>
    %97 = arith.divf %95, %96 : vector<16x1xf32>
    %c0_19 = arith.constant 0 : index
    %c0_20 = arith.constant 0 : index
    %98 = vector.load %arg7[%c0_19, %c0_20] : memref<4x16xbf16, #tpu.memory_space<vmem>>, vector<4x16xbf16>
    %99 = arith.truncf %97 : vector<16x1xf32> to vector<16x1xbf16>
    %cst_21 = arith.constant dense<0.000000e+00> : vector<4x1xf32>
    %100 = tpu.matmul %98, %99, %cst_21 {dimension_numbers = #tpu.dot_dimension_numbers<[1], [0], [0], [1], [0, 0, 1, 1], [], []>} : vector<4x16xbf16>, vector<16x1xbf16>, vector<4x1xf32> -> vector<4x1xf32>
    %c0_22 = arith.constant 0 : index
    %c0_23 = arith.constant 0 : index
    %101 = vector.load %arg8[%c0_22, %c0_23] : memref<4x1xf32, #tpu.memory_space<vmem>>, vector<4x1xf32>
    %102 = arith.addf %100, %101 : vector<4x1xf32>
    %cst_24 = arith.constant 0.000000e+00 : f32
    %103 = vector.broadcast %cst_24 : f32 to vector<4x1xf32>
    %104 = arith.maximumf %102, %103 : vector<4x1xf32>
    %c0_25 = arith.constant 0 : index
    %c0_26 = arith.constant 0 : index
    %105 = vector.load %arg9[%c0_25, %c0_26] : memref<16x4xbf16, #tpu.memory_space<vmem>>, vector<16x4xbf16>
    %106 = arith.truncf %104 : vector<4x1xf32> to vector<4x1xbf16>
    %cst_27 = arith.constant dense<0.000000e+00> : vector<16x1xf32>
    %107 = tpu.matmul %105, %106, %cst_27 {dimension_numbers = #tpu.dot_dimension_numbers<[1], [0], [0], [1], [0, 0, 1, 1], [], []>} : vector<16x4xbf16>, vector<4x1xbf16>, vector<16x1xf32> -> vector<16x1xf32>
    %c0_28 = arith.constant 0 : index
    %c0_29 = arith.constant 0 : index
    %108 = vector.load %arg10[%c0_28, %c0_29] : memref<16x1xf32, #tpu.memory_space<vmem>>, vector<16x1xf32>
    %109 = arith.addf %107, %108 : vector<16x1xf32>
    %110 = arith.negf %109 : vector<16x1xf32>
    %111 = math.exp %110 : vector<16x1xf32>
    %cst_30 = arith.constant 1.000000e+00 : f32
    %112 = vector.broadcast %cst_30 : f32 to vector<16x1xf32>
    %113 = arith.addf %112, %111 : vector<16x1xf32>
    %114 = arith.divf %112, %113 : vector<16x1xf32>
    %115 = vector.broadcast %114 : vector<16x1xf32> to vector<16x256xf32>
    %116 = arith.mulf %93, %115 : vector<16x256xf32>
    %117 = arith.truncf %116 : vector<16x256xf32> to vector<16x256xbf16>
    %c0_31 = arith.constant 0 : index
    %c0_32 = arith.constant 0 : index
    %118 = vector.load %arg11[%c0_31, %c0_32] : memref<4x16xbf16, #tpu.memory_space<vmem>>, vector<4x16xbf16>
    %cst_33 = arith.constant dense<0.000000e+00> : vector<4x256xf32>
    %119 = tpu.matmul %118, %117, %cst_33 {dimension_numbers = #tpu.dot_dimension_numbers<[1], [0], [0], [1], [0, 0, 1, 1], [], []>} : vector<4x16xbf16>, vector<16x256xbf16>, vector<4x256xf32> -> vector<4x256xf32>
    %c0_34 = arith.constant 0 : index
    %c0_35 = arith.constant 0 : index
    %120 = vector.load %arg12[%c0_34, %c0_35] : memref<4x1xf32, #tpu.memory_space<vmem>>, vector<4x1xf32>
    %121 = vector.broadcast %120 : vector<4x1xf32> to vector<4x256xf32>
    %122 = arith.addf %119, %121 : vector<4x256xf32>
    %123 = arith.addf %122, %1 : vector<4x256xf32>
    %c0_36 = arith.constant 0 : index
    %c0_37 = arith.constant 0 : index
    %c0_38 = arith.constant 0 : index
    %124 = vector.load %arg13[%c0_36, %c0_37, %c0_38] : memref<1x4x256xf32, #tpu.memory_space<vmem>>, vector<1x4x256xf32>
    %125 = vector.shape_cast %124 : vector<1x4x256xf32> to vector<4x256xf32>
    %126 = vector.shape_cast %123 : vector<4x256xf32> to vector<1x4x256xf32>
    tpu.vector_store %arg13[%c0_36, %c0_37, %c0_38], %126 {strides = array<i32>} : memref<1x4x256xf32, #tpu.memory_space<vmem>>, vector<1x4x256xf32>,
    return
  }
  func.func @transform_0(%arg0: i32) -> (i32, i32, i32) {
    %c0_i32 = arith.constant 0 : i32
    %c0_i32_0 = arith.constant 0 : i32
    %c0_i32_1 = arith.constant 0 : i32
    return %arg0, %c0_i32, %c0_i32_0 : i32, i32, i32
  }
  func.func @transform_1(%arg0: i32) -> (i32, i32) {
    %c0_i32 = arith.constant 0 : i32
    %c0_i32_0 = arith.constant 0 : i32
    %c0_i32_1 = arith.constant 0 : i32
    return %c0_i32, %c0_i32_0 : i32, i32
  }
  func.func @transform_2(%arg0: i32) -> (i32, i32) {
    %c0_i32 = arith.constant 0 : i32
    %c0_i32_0 = arith.constant 0 : i32
    %c0_i32_1 = arith.constant 0 : i32
    return %c0_i32, %c0_i32_0 : i32, i32
  }
  func.func @transform_3(%arg0: i32) -> (i32, i32) {
    %c0_i32 = arith.constant 0 : i32
    %c0_i32_0 = arith.constant 0 : i32
    %c0_i32_1 = arith.constant 0 : i32
    return %c0_i32, %c0_i32_0 : i32, i32
  }
  func.func @transform_4(%arg0: i32) -> (i32, i32) {
    %c0_i32 = arith.constant 0 : i32
    %c0_i32_0 = arith.constant 0 : i32
    %c0_i32_1 = arith.constant 0 : i32
    return %c0_i32, %c0_i32_0 : i32, i32
  }
  func.func @transform_5(%arg0: i32) -> (i32, i32) {
    %c0_i32 = arith.constant 0 : i32
    %c0_i32_0 = arith.constant 0 : i32
    %c0_i32_1 = arith.constant 0 : i32
    return %c0_i32, %c0_i32_0 : i32, i32
  }
  func.func @transform_6(%arg0: i32) -> (i32, i32) {
    %c0_i32 = arith.constant 0 : i32
    %c0_i32_0 = arith.constant 0 : i32
    %c0_i32_1 = arith.constant 0 : i32
    return %c0_i32, %c0_i32_0 : i32, i32
  }
  func.func @transform_7(%arg0: i32) -> (i32, i32) {
    %c0_i32 = arith.constant 0 : i32
    %c0_i32_0 = arith.constant 0 : i32
    %c0_i32_1 = arith.constant 0 : i32
    return %c0_i32, %c0_i32_0 : i32, i32
  }
  func.func @transform_8(%arg0: i32) -> (i32, i32) {
    %c0_i32 = arith.constant 0 : i32
    %c0_i32_0 = arith.constant 0 : i32
    %c0_i32_1 = arith.constant 0 : i32
    return %c0_i32, %c0_i32_0 : i32, i32
  }
  func.func @transform_9(%arg0: i32) -> (i32, i32) {
    %c0_i32 = arith.constant 0 : i32
    %c0_i32_0 = arith.constant 0 : i32
    %c0_i32_1 = arith.constant 0 : i32
    return %c0_i32, %c0_i32_0 : i32, i32
  }
  func.func @transform_10(%arg0: i32) -> (i32, i32) {
    %c0_i32 = arith.constant 0 : i32
    %c0_i32_0 = arith.constant 0 : i32
    %c0_i32_1 = arith.constant 0 : i32
    return %c0_i32, %c0_i32_0 : i32, i32
  }
  func.func @transform_11(%arg0: i32) -> (i32, i32) {
    %c0_i32 = arith.constant 0 : i32
    %c0_i32_0 = arith.constant 0 : i32
    %c0_i32_1 = arith.constant 0 : i32
    return %c0_i32, %c0_i32_0 : i32, i32
  }
  func.func @transform_12(%arg0: i32) -> (i32, i32, i32) {
    %c0_i32 = arith.constant 0 : i32
    %c0_i32_0 = arith.constant 0 : i32
    %c0_i32_1 = arith.constant 0 : i32
    return %arg0, %c0_i32, %c0_i32_0 : i32, i32, i32
  }
}

</mosaic_0001>

<llo_original>
// kernel: base_op_forward.1
$region0: #{base_op_forward.1}
  #allocation0 [shape = 'u32[]', space=smem, size = 0x4, offset = 0x4, fixed_abs, tag = 'smem constant byte address 0x4 - core index']
  #allocation1 [shape = 'u32[144,128]{1,0:T(1,128)}', space=vmem, size = 0x12000, scoped, tag = 'internal scratch']
  %s0 = inlined_call_operand.vmem [shape: f32[2,4,256], index: 0, kind: input, shape index: {}]
  %s1 = inlined_call_operand.vmem [shape: f32[4,256], index: 1, kind: input, shape index: {}]
  %s2 = inlined_call_operand.vmem [shape: bf16[16,4], index: 2, kind: input, shape index: {}]
  %s3 = inlined_call_operand.vmem [shape: f32[16,1], index: 3, kind: input, shape index: {}]
  %s4 = inlined_call_operand.vmem [shape: f32[16,9], index: 4, kind: input, shape index: {}]
  %s5 = inlined_call_operand.vmem [shape: f32[16,1], index: 5, kind: input, shape index: {}]
  %s6 = inlined_call_operand.vmem [shape: bf16[4,16], index: 6, kind: input, shape index: {}]
  %s7 = inlined_call_operand.vmem [shape: f32[4,1], index: 7, kind: input, shape index: {}]
  %s8 = inlined_call_operand.vmem [shape: bf16[16,4], index: 8, kind: input, shape index: {}]
  %s9 = inlined_call_operand.vmem [shape: f32[16,1], index: 9, kind: input, shape index: {}]
  %s10 = inlined_call_operand.vmem [shape: bf16[4,16], index: 10, kind: input, shape index: {}]
  %s11 = inlined_call_operand.vmem [shape: f32[4,1], index: 11, kind: input, shape index: {}]
  %s12 = inlined_call_operand.vmem [shape: f32[2,4,256], index: 12, kind: output, shape index: {}]
  %s13 = sld [smem:[#allocation0]]
  $region81: #{base_op_forward.1} parent=0
    _
  %s15 = ssub.s32 1, %s13
  %s16 = scalar_select 0, %s15, %s13
  loop: start=0, step=1, limit=4
  $region2: #{base_op_forward.1} parent=0 // loop_pre_header
    _
  $region3: #{base_op_forward.1} parent=0 // loop_header
    %s18 = sphi 0, %s22
    %p19 = scmp.ge.s32.totalorder %s18, 4
    %s28 = sphi 0, %s30
    %s31 = sphi 0, %s28
    %s32 = sphi 0, %s31
    %s48 = sphi 0, %s32
    %s52 = sphi 0, %s52
    %s54 = sphi 0, %s52
    %s55 = sphi 0, %s54
    %s69 = sphi 0, %s55
    %s73 = sphi 0, %s73
    %s75 = sphi 0, %s73
    %s76 = sphi 0, %s75
    %s90 = sphi 0, %s76
    %s94 = sphi 0, %s94
    %s96 = sphi 0, %s94
    %s97 = sphi 0, %s96
    %s111 = sphi 0, %s97
    %s115 = sphi 0, %s115
    %s117 = sphi 0, %s115
    %s118 = sphi 0, %s117
    %s132 = sphi 0, %s118
    %s136 = sphi 0, %s136
    %s138 = sphi 0, %s136
    %s139 = sphi 0, %s138
    %s153 = sphi 0, %s139
    %s157 = sphi 0, %s157
    %s159 = sphi 0, %s157
    %s160 = sphi 0, %s159
    %s174 = sphi 0, %s160
    %s178 = sphi 0, %s178
    %s180 = sphi 0, %s178
    %s181 = sphi 0, %s180
    %s195 = sphi 0, %s181
    %s199 = sphi 0, %s199
    %s201 = sphi 0, %s199
    %s202 = sphi 0, %s201
    %s216 = sphi 0, %s202
    %s220 = sphi 0, %s220
    %s222 = sphi 0, %s220
    %s223 = sphi 0, %s222
    %s237 = sphi 0, %s223
    %s241 = sphi 0, %s241
    %s243 = sphi 0, %s241
    %s244 = sphi 0, %s243
    %s258 = sphi 0, %s244
    %s262 = sphi 0, %s262
    %s264 = sphi 0, %s262
    %s265 = sphi 0, %s264
    %s279 = sphi 0, %s265
    %s285 = sphi 0, %s287
    %s288 = sphi 0, %s285
    %s289 = sphi 0, %s288
    %s305 = sphi 0, %s289
  $region4: #{base_op_forward.1} parent=0 // loop_header_branch
    %21 = sbr.rel (%p19) target = $region8
  $region5: #{base_op_forward.1} parent=0 // loop_body
    %s23 = ssub.s32 %s18, 1
    %s24 = ssub.s32 %s18, 2
    %s25 = sadd.s32 %s18, 1
    %s26 = ssub.s32 %s18, %s25
    %p27 = scmp.eq.s32.totalorder %s26, 0
    %s29 = sadd.s32 %s28, 1
    %s30 = scalar_select %p27, %s28, %s29
    %p33 = pneg %p27
    %p34 = scmp.eq.s32.totalorder %s18, 1
    %p35 = por %p33, %p34
    %p36 = scmp.ne.s32.totalorder %s28, %s31
    %p37 = scmp.eq.s32.totalorder %s18, 0
    %p38 = por %p36, %p37
    %p39 = scmp.ne.s32.totalorder %s28, %s31
    %p40 = scmp.eq.s32.totalorder %s23, 1
    %p41 = por %p39, %p40
    %p42 = scmp.ne.s32.totalorder %s31, %s32
    %p43 = scmp.eq.s32.totalorder %s23, 0
    %p44 = por %p42, %p43
    %p45 = scmp.ne.s32.totalorder %s31, %s32
    %p46 = scmp.eq.s32.totalorder %s24, 1
    %p47 = por %p45, %p46
    %p49 = scmp.ne.s32.totalorder %s32, %s48
    %p50 = scmp.eq.s32.totalorder %s24, 0
    %p51 = por %p49, %p50
    %s53 = sadd.s32 %s52, 1
    %p56 = scmp.eq.s32.totalorder %s18, 1
    %p57 = scmp.ne.s32.totalorder %s52, %s54
    %p58 = scmp.eq.s32.totalorder %s18, 0
    %p59 = por %p57, %p58
    %p60 = scmp.ne.s32.totalorder %s52, %s54
    %p61 = scmp.eq.s32.totalorder %s23, 1
    %p62 = por %p60, %p61
    %p63 = scmp.ne.s32.totalorder %s54, %s55
    %p64 = scmp.eq.s32.totalorder %s23, 0
    %p65 = por %p63, %p64
    %p66 = scmp.ne.s32.totalorder %s54, %s55
    %p67 = scmp.eq.s32.totalorder %s24, 1
    %p68 = por %p66, %p67
    %p70 = scmp.ne.s32.totalorder %s55, %s69
    %p71 = scmp.eq.s32.totalorder %s24, 0
    %p72 = por %p70, %p71
    %s74 = sadd.s32 %s73, 1
    %p77 = scmp.eq.s32.totalorder %s18, 1
    %p78 = scmp.ne.s32.totalorder %s73, %s75
    %p79 = scmp.eq.s32.totalorder %s18, 0
    %p80 = por %p78, %p79
    %p81 = scmp.ne.s32.totalorder %s73, %s75
    %p82 = scmp.eq.s32.totalorder %s23, 1
    %p83 = por %p81, %p82
    %p84 = scmp.ne.s32.totalorder %s75, %s76
    %p85 = scmp.eq.s32.totalorder %s23, 0
    %p86 = por %p84, %p85
    %p87 = scmp.ne.s32.totalorder %s75, %s76
    %p88 = scmp.eq.s32.totalorder %s24, 1
    %p89 = por %p87, %p88
    %p91 = scmp.ne.s32.totalorder %s76, %s90
    %p92 = scmp.eq.s32.totalorder %s24, 0
    %p93 = por %p91, %p92
    %s95 = sadd.s32 %s94, 1
    %p98 = scmp.eq.s32.totalorder %s18, 1
    %p99 = scmp.ne.s32.totalorder %s94, %s96
    %p100 = scmp.eq.s32.totalorder %s18, 0
    %p101 = por %p99, %p100
    %p102 = scmp.ne.s32.totalorder %s94, %s96
    %p103 = scmp.eq.s32.totalorder %s23, 1
    %p104 = por %p102, %p103
    %p105 = scmp.ne.s32.totalorder %s96, %s97
    %p106 = scmp.eq.s32.totalorder %s23, 0
    %p107 = por %p105, %p106
    %p108 = scmp.ne.s32.totalorder %s96, %s97
    %p109 = scmp.eq.s32.totalorder %s24, 1
    %p110 = por %p108, %p109
    %p112 = scmp.ne.s32.totalorder %s97, %s111
    %p113 = scmp.eq.s32.totalorder %s24, 0
    %p114 = por %p112, %p113
    %s116 = sadd.s32 %s115, 1
    %p119 = scmp.eq.s32.totalorder %s18, 1
    %p120 = scmp.ne.s32.totalorder %s115, %s117
    %p121 = scmp.eq.s32.totalorder %s18, 0
    %p122 = por %p120, %p121
    %p123 = scmp.ne.s32.totalorder %s115, %s117
    %p124 = scmp.eq.s32.totalorder %s23, 1
    %p125 = por %p123, %p124
    %p126 = scmp.ne.s32.totalorder %s117, %s118
    %p127 = scmp.eq.s32.totalorder %s23, 0
    %p128 = por %p126, %p127
    %p129 = scmp.ne.s32.totalorder %s117, %s118
    %p130 = scmp.eq.s32.totalorder %s24, 1
    %p131 = por %p129, %p130
    %p133 = scmp.ne.s32.totalorder %s118, %s132
    %p134 = scmp.eq.s32.totalorder %s24, 0
    %p135 = por %p133, %p134
    %s137 = sadd.s32 %s136, 1
    %p140 = scmp.eq.s32.totalorder %s18, 1
    %p141 = scmp.ne.s32.totalorder %s136, %s138
    %p142 = scmp.eq.s32.totalorder %s18, 0
    %p143 = por %p141, %p142
    %p144 = scmp.ne.s32.totalorder %s136, %s138
    %p145 = scmp.eq.s32.totalorder %s23, 1
    %p146 = por %p144, %p145
    %p147 = scmp.ne.s32.totalorder %s138, %s139
    %p148 = scmp.eq.s32.totalorder %s23, 0
    %p149 = por %p147, %p148
    %p150 = scmp.ne.s32.totalorder %s138, %s139
    %p151 = scmp.eq.s32.totalorder %s24, 1
    %p152 = por %p150, %p151
    %p154 = scmp.ne.s32.totalorder %s139, %s153
    %p155 = scmp.eq.s32.totalorder %s24, 0
    %p156 = por %p154, %p155
    %s158 = sadd.s32 %s157, 1
    %p161 = scmp.eq.s32.totalorder %s18, 1
    %p162 = scmp.ne.s32.totalorder %s157, %s159
    %p163 = scmp.eq.s32.totalorder %s18, 0
    %p164 = por %p162, %p163
    %p165 = scmp.ne.s32.totalorder %s157, %s159
    %p166 = scmp.eq.s32.totalorder %s23, 1
    %p167 = por %p165, %p166
    %p168 = scmp.ne.s32.totalorder %s159, %s160
    %p169 = scmp.eq.s32.totalorder %s23, 0
    %p170 = por %p168, %p169
    %p171 = scmp.ne.s32.totalorder %s159, %s160
    %p172 = scmp.eq.s32.totalorder %s24, 1
    %p173 = por %p171, %p172
    %p175 = scmp.ne.s32.totalorder %s160, %s174
    %p176 = scmp.eq.s32.totalorder %s24, 0
    %p177 = por %p175, %p176
    %s179 = sadd.s32 %s178, 1
    %p182 = scmp.eq.s32.totalorder %s18, 1
    %p183 = scmp.ne.s32.totalorder %s178, %s180
    %p184 = scmp.eq.s32.totalorder %s18, 0
    %p185 = por %p183, %p184
    %p186 = scmp.ne.s32.totalorder %s178, %s180
    %p187 = scmp.eq.s32.totalorder %s23, 1
    %p188 = por %p186, %p187
    %p189 = scmp.ne.s32.totalorder %s180, %s181
    %p190 = scmp.eq.s32.totalorder %s23, 0
    %p191 = por %p189, %p190
    %p192 = scmp.ne.s32.totalorder %s180, %s181
    %p193 = scmp.eq.s32.totalorder %s24, 1
    %p194 = por %p192, %p193
    %p196 = scmp.ne.s32.totalorder %s181, %s195
    %p197 = scmp.eq.s32.totalorder %s24, 0
    %p198 = por %p196, %p197
    %s200 = sadd.s32 %s199, 1
    %p203 = scmp.eq.s32.totalorder %s18, 1
    %p204 = scmp.ne.s32.totalorder %s199, %s201
    %p205 = scmp.eq.s32.totalorder %s18, 0
    %p206 = por %p204, %p205
    %p207 = scmp.ne.s32.totalorder %s199, %s201
    %p208 = scmp.eq.s32.totalorder %s23, 1
    %p209 = por %p207, %p208
    %p210 = scmp.ne.s32.totalorder %s201, %s202
    %p211 = scmp.eq.s32.totalorder %s23, 0
    %p212 = por %p210, %p211
    %p213 = scmp.ne.s32.totalorder %s201, %s202
    %p214 = scmp.eq.s32.totalorder %s24, 1
    %p215 = por %p213, %p214
    %p217 = scmp.ne.s32.totalorder %s202, %s216
    %p218 = scmp.eq.s32.totalorder %s24, 0
    %p219 = por %p217, %p218
    %s221 = sadd.s32 %s220, 1
    %p224 = scmp.eq.s32.totalorder %s18, 1
    %p225 = scmp.ne.s32.totalorder %s220, %s222
    %p226 = scmp.eq.s32.totalorder %s18, 0
    %p227 = por %p225, %p226
    %p228 = scmp.ne.s32.totalorder %s220, %s222
    %p229 = scmp.eq.s32.totalorder %s23, 1
    %p230 = por %p228, %p229
    %p231 = scmp.ne.s32.totalorder %s222, %s223
    %p232 = scmp.eq.s32.totalorder %s23, 0
    %p233 = por %p231, %p232
    %p234 = scmp.ne.s32.totalorder %s222, %s223
    %p235 = scmp.eq.s32.totalorder %s24, 1
    %p236 = por %p234, %p235
    %p238 = scmp.ne.s32.totalorder %s223, %s237
    %p239 = scmp.eq.s32.totalorder %s24, 0
    %p240 = por %p238, %p239
    %s242 = sadd.s32 %s241, 1
    %p245 = scmp.eq.s32.totalorder %s18, 1
    %p246 = scmp.ne.s32.totalorder %s241, %s243
    %p247 = scmp.eq.s32.totalorder %s18, 0
    %p248 = por %p246, %p247
    %p249 = scmp.ne.s32.totalorder %s241, %s243
    %p250 = scmp.eq.s32.totalorder %s23, 1
    %p251 = por %p249, %p250
    %p252 = scmp.ne.s32.totalorder %s243, %s244
    %p253 = scmp.eq.s32.totalorder %s23, 0
    %p254 = por %p252, %p253
    %p255 = scmp.ne.s32.totalorder %s243, %s244
    %p256 = scmp.eq.s32.totalorder %s24, 1
    %p257 = por %p255, %p256
    %p259 = scmp.ne.s32.totalorder %s244, %s258
    %p260 = scmp.eq.s32.totalorder %s24, 0
    %p261 = por %p259, %p260
    %s263 = sadd.s32 %s262, 1
    %p266 = scmp.eq.s32.totalorder %s18, 1
    %p267 = scmp.ne.s32.totalorder %s262, %s264
    %p268 = scmp.eq.s32.totalorder %s18, 0
    %p269 = por %p267, %p268
    %p270 = scmp.ne.s32.totalorder %s262, %s264
    %p271 = scmp.eq.s32.totalorder %s23, 1
    %p272 = por %p270, %p271
    %p273 = scmp.ne.s32.totalorder %s264, %s265
    %p274 = scmp.eq.s32.totalorder %s23, 0
    %p275 = por %p273, %p274
    %p276 = scmp.ne.s32.totalorder %s264, %s265
    %p277 = scmp.eq.s32.totalorder %s24, 1
    %p278 = por %p276, %p277
    %p280 = scmp.ne.s32.totalorder %s265, %s279
    %p281 = scmp.eq.s32.totalorder %s24, 0
    %p282 = por %p280, %p281
    %s283 = ssub.s32 %s18, %s25
    %p284 = scmp.eq.s32.totalorder %s283, 0
    %s286 = sadd.s32 %s285, 1
    %s287 = scalar_select %p284, %s285, %s286
    %p290 = pneg %p284
    %p291 = scmp.eq.s32.totalorder %s18, 1
    %p292 = por %p290, %p291
    %p293 = scmp.ne.s32.totalorder %s285, %s288
    %p294 = scmp.eq.s32.totalorder %s18, 0
    %p295 = por %p293, %p294
    %p296 = scmp.ne.s32.totalorder %s285, %s288
    %p297 = scmp.eq.s32.totalorder %s23, 1
    %p298 = por %p296, %p297
    %p299 = scmp.ne.s32.totalorder %s288, %s289
    %p300 = scmp.eq.s32.totalorder %s23, 0
    %p301 = por %p299, %p300
    %p302 = scmp.ne.s32.totalorder %s288, %s289
    %p303 = scmp.eq.s32.totalorder %s24, 1
    %p304 = por %p302, %p303
    %p306 = scmp.ne.s32.totalorder %s289, %s305
    %p307 = scmp.eq.s32.totalorder %s24, 0
    %p308 = por %p306, %p307
    %p309 = scmp.le.s32.totalorder 1, %s18
    %p310 = scmp.lt.s32.totalorder %s18, 3
    %p311 = pnand %p309, %p310
    %p312 = pneg %p311
    // Predicated region
    $region9: #{base_op_forward.1} parent=5 // pred_check
      _
    $region10: #{base_op_forward.1} parent=5 // pred_check_branch
      %314 = sbr.rel (%p311) target = $region12
    $region11: #{base_op_forward.1} parent=5 // pred_region
      %s315 = ssub.s32 %s18, 1
      // Predicated region
      $region13: #{base_op_forward.1} parent=11 // pred_check
        %p316 = pneg %p65
      $region14: #{base_op_forward.1} parent=11 // pred_check_branch
        %318 = sbr.rel (%p316) target = $region16
      $region15: #{base_op_forward.1} parent=11 // pred_region
        _
      $region16: #{base_op_forward.1} parent=11 // pred_fallthru
        _
      // Predicated region
      $region17: #{base_op_forward.1} parent=11 // pred_check
        %p319 = pneg %p86
      $region18: #{base_op_forward.1} parent=11 // pred_check_branch
        %321 = sbr.rel (%p319) target = $region20
      $region19: #{base_op_forward.1} parent=11 // pred_region
        _
      $region20: #{base_op_forward.1} parent=11 // pred_fallthru
        _
      // Predicated region
      $region21: #{base_op_forward.1} parent=11 // pred_check
        %p322 = pneg %p107
      $region22: #{base_op_forward.1} parent=11 // pred_check_branch
        %324 = sbr.rel (%p322) target = $region24
      $region23: #{base_op_forward.1} parent=11 // pred_region
        _
      $region24: #{base_op_forward.1} parent=11 // pred_fallthru
        _
      // Predicated region
      $region25: #{base_op_forward.1} parent=11 // pred_check
        %p325 = pneg %p128
      $region26: #{base_op_forward.1} parent=11 // pred_check_branch
        %327 = sbr.rel (%p325) target = $region28
      $region27: #{base_op_forward.1} parent=11 // pred_region
        _
      $region28: #{base_op_forward.1} parent=11 // pred_fallthru
        _
      // Predicated region
      $region29: #{base_op_forward.1} parent=11 // pred_check
        %p328 = pneg %p149
      $region30: #{base_op_forward.1} parent=11 // pred_check_branch
        %330 = sbr.rel (%p328) target = $region32
      $region31: #{base_op_forward.1} parent=11 // pred_region
        _
      $region32: #{base_op_forward.1} parent=11 // pred_fallthru
        _
      // Predicated region
      $region33: #{base_op_forward.1} parent=11 // pred_check
        %p331 = pneg %p170
      $region34: #{base_op_forward.1} parent=11 // pred_check_branch
        %333 = sbr.rel (%p331) target = $region36
      $region35: #{base_op_forward.1} parent=11 // pred_region
        _
      $region36: #{base_op_forward.1} parent=11 // pred_fallthru
        _
      // Predicated region
      $region37: #{base_op_forward.1} parent=11 // pred_check
        %p334 = pneg %p191
      $region38: #{base_op_forward.1} parent=11 // pred_check_branch
        %336 = sbr.rel (%p334) target = $region40
      $region39: #{base_op_forward.1} parent=11 // pred_region
        _
      $region40: #{base_op_forward.1} parent=11 // pred_fallthru
        _
      // Predicated region
      $region41: #{base_op_forward.1} parent=11 // pred_check
        %p337 = pneg %p212
      $region42: #{base_op_forward.1} parent=11 // pred_check_branch
        %339 = sbr.rel (%p337) target = $region44
      $region43: #{base_op_forward.1} parent=11 // pred_region
        _
      $region44: #{base_op_forward.1} parent=11 // pred_fallthru
        _
      // Predicated region
      $region45: #{base_op_forward.1} parent=11 // pred_check
        %p340 = pneg %p233
      $region46: #{base_op_forward.1} parent=11 // pred_check_branch
        %342 = sbr.rel (%p340) target = $region48
      $region47: #{base_op_forward.1} parent=11 // pred_region
        _
      $region48: #{base_op_forward.1} parent=11 // pred_fallthru
        _
      // Predicated region
      $region49: #{base_op_forward.1} parent=11 // pred_check
        %p343 = pneg %p254
      $region50: #{base_op_forward.1} parent=11 // pred_check_branch
        %345 = sbr.rel (%p343) target = $region52
      $region51: #{base_op_forward.1} parent=11 // pred_region
        _
      $region52: #{base_op_forward.1} parent=11 // pred_fallthru
        _
      // Predicated region
      $region53: #{base_op_forward.1} parent=11 // pred_check
        %p346 = pneg %p275
      $region54: #{base_op_forward.1} parent=11 // pred_check_branch
        %348 = sbr.rel (%p346) target = $region56
      $region55: #{base_op_forward.1} parent=11 // pred_region
        _
      $region56: #{base_op_forward.1} parent=11 // pred_fallthru
        _
    $region12: #{base_op_forward.1} parent=5 // pred_fallthru
      _
    %p349 = scmp.lt.s32.totalorder %s18, 2
    // Predicated region
    $region57: #{base_op_forward.1} parent=5 // pred_check
      %p350 = pneg %p349
    $region58: #{base_op_forward.1} parent=5 // pred_check_branch
      %352 = sbr.rel (%p350) target = $region60
    $region59: #{base_op_forward.1} parent=5 // pred_region
      // Predicated region
      $region61: #{base_op_forward.1} parent=59 // pred_check
        %p353 = pneg %p38
      $region62: #{base_op_forward.1} parent=59 // pred_check_branch
        %355 = sbr.rel (%p353) target = $region64
      $region63: #{base_op_forward.1} parent=59 // pred_region
        %p356 = scmp.lt.s32.totalorder %s18, 1
        %s357 = scalar_select %p356, %s18, 1
        %s358 = smul.addr %s357, 2
        %s359 = smul.addr %s358, 4
        %s360 = scalar_lea.vmem %s0, %s359
      $region64: #{base_op_forward.1} parent=59 // pred_fallthru
        _
    $region60: #{base_op_forward.1} parent=5 // pred_fallthru
      _
    %p361 = scmp.le.s32.totalorder 1, %s18
    %p362 = scmp.lt.s32.totalorder %s18, 3
    %p363 = pnand %p361, %p362
    %p364 = pneg %p363
    // Predicated region
    $region65: #{base_op_forward.1} parent=5 // pred_check
      _
    $region66: #{base_op_forward.1} parent=5 // pred_check_branch
      %366 = sbr.rel (%p363) target = $region68
    $region67: #{base_op_forward.1} parent=5 // pred_region
      %s367 = ssub.s32 %s18, 1
      %p368 = scmp.lt.s32.totalorder %s23, 1
      %s369 = scalar_select %p368, %s23, 1
      %s370 = smul.addr %s369, 2
      %s371 = smul.addr %s370, 4
      %s372 = scalar_lea.vmem %s0, %s371
      %p373 = pneg %p44
      %p374 = pneg %p41
      %p375 = pneg %p65
      %p376 = pneg %p62
      %p377 = pneg %p86
      %p378 = pneg %p83
      %p379 = pneg %p107
      %p380 = pneg %p104
      %p381 = pneg %p128
      %p382 = pneg %p125
      %p383 = pneg %p149
      %p384 = pneg %p146
      %p385 = pneg %p170
      %p386 = pneg %p167
      %p387 = pneg %p191
      %p388 = pneg %p188
      %p389 = pneg %p212
      %p390 = pneg %p209
      %p391 = pneg %p233
      %p392 = pneg %p230
      %p393 = pneg %p254
      %p394 = pneg %p251
      %p395 = pneg %p275
      %p396 = pneg %p272
      %p397 = pneg %p301
      %p398 = pneg %p298
      %p399 = scmp.lt.s32.totalorder %s23, 1
      %s400 = scalar_select %p399, %s23, 1
      %s401 = smul.addr %s400, 2
      %s402 = smul.addr %s401, 4
      %s403 = scalar_lea.vmem %s12, %s402
      %p404 = scmp.lt.s32.totalorder %s23, 1
      %s405 = scalar_select %p404, %s23, 1
      %s406 = smul.addr %s405, 2
      %s407 = smul.addr %s406, 4
      %s408 = scalar_lea.vmem %s0, %s407
      %p409 = scmp.lt.s32.totalorder %s23, 1
      %s410 = scalar_select %p409, %s23, 1
      %s411 = smul.addr %s410, 2
      %s412 = smul.addr %s411, 4
      %s413 = scalar_lea.vmem %s12, %s412
      %v415 = vld [vmem:[%s408] sm:$0xff]
      %v416 = vld [vmem:[%s2] sm:$0xf]
      %v417 = vld [vmem:[%s2 + $0x4] sm:$0xf]
      %v419 = vcombine.high %v415, %v415
      %v421 = vpack.c.bf16 %v415, %v415
      %v422 = vpack.c.bf16 %v419, %v419
      %v423 = vld [vmem:[%s3] sm:$0xff]
      %v424 = vld [vmem:[%s3 + $0x8] sm:$0xff]
      %426 = vset.pattern.permute.xlu0 0
      %427 = vperm.xlu0 %426, %v423
      %v428 = vpop.permute.xlu0 %427
      %431 = vset.pattern.permute.xlu0 0
      %432 = vperm.xlu0 %431, %v424
      %v433 = vpop.permute.xlu0 %432
      %v437 = vunpack.c.l.b16 %v416
      %v438 = vunpack.c.l.b16 %v417
      %v439 = vpack.c.b16 %v438, %v437
      %vm440 = vcmask 31744
      %v442 = vsel %vm440, %v439, 0
      %vm444 = vcmask 1041408
      %v446 = vsel %vm444, %v421, 0
      %v449 = vsel %vm444, %v422, 0
      %451 = vmatprep.subr.bf16.mxu0 0
      %452 = vmatpush1.bf16.msra.mxu0 0
      %453 = vmatprep.subr.bf16.mxu0 0
      %454 = vmatpush1.bf16.msra.mxu0 0
      %455 = vmatprep.subr.bf16.mxu0 0
      %456 = vmatpush1.bf16.msra.mxu0 0
      %457 = vmatprep.subr.bf16.mxu0 0
      %458 = vmatpush1.bf16.msra.mxu0 0
      %459 = vmatprep.subr.bf16.mxu0 0
      %460 = vmatpush1.bf16.msra.mxu0 0
      %461 = vmatprep.subr.bf16.mxu0 0
      %462 = vmatpush1.bf16.msra.mxu0 0
      %463 = vmatprep.subr.bf16.mxu0 0
      %464 = vmatpush1.bf16.msra.mxu0 0
      %465 = vmatprep.subr.bf16.mxu0 %v449
      %466 = vmatpush1.bf16.msra.mxu0 %v446
      %467 = vmatprep.subr.bf16.mxu0 0
      %468 = vmatpush2.bf16.msra.mxu0 0
      %469 = vmatprep.subr.bf16.mxu0 0
      %470 = vmatpush2.bf16.msra.mxu0 0
      %471 = vmatprep.subr.bf16.mxu0 0
      %472 = vmatpush2.bf16.msra.mxu0 0
      %473 = vmatprep.subr.bf16.mxu0 0
      %474 = vmatpush2.bf16.msra.mxu0 0
      %475 = vmatprep.subr.bf16.mxu0 0
      %476 = vmatpush2.bf16.msra.mxu0 0
      %477 = vmatprep.subr.bf16.mxu0 0
      %478 = vmatpush2.bf16.msra.mxu0 0
      %479 = vmatprep.subr.bf16.mxu0 0
      %480 = vmatpush2.bf16.msra.mxu0 0
      %481 = vmatprep.subr.bf16.mxu0 0
      %482 = vmatpush2.bf16.msra.mxu0 0
      %483 = vmatprep.mubr.bf16.mxu0 0
      %484 = vmatmul.mubr.bf16.gmra.mxu0 %v442
      %v485 = vpop.f32.mrf.mxu0
      %v486 = vadd.f32 %v428, %v485
      %v487 = vpop.f32.mrf.mxu0
      %v488 = vadd.f32 %v428, %v487
      %v489 = vpop.f32.mrf.mxu0
      %v490 = vadd.f32 %v433, %v489
      %v491 = vpop.f32.mrf.mxu0
      %v492 = vadd.f32 %v433, %v491
      %493 = vdwg.mxu0
      %v494 = vmax.f32 %v486, 0.0
      %v495 = vmax.f32 %v488, 0.0
      %v496 = vmax.f32 %v490, 0.0
      %v497 = vmax.f32 %v492, 0.0
      %v498 = vmin.f32 %v494, 6.0
      %v499 = vmin.f32 %v495, 6.0
      %v500 = vmin.f32 %v496, 6.0
      %v501 = vmin.f32 %v497, 6.0
      %v502 = vld [vmem:[%s1] sm:$0xff]
      %v503 = vld [vmem:[%s4] sm:$0xff]
      %v504 = vld [vmem:[%s4 + $0x8] sm:$0xff]
      %505 = vrot.lane.b32.xlu0 %v498, 17
      %v506 = vpop.permute.xlu0 %505
      %507 = vrot.lane.b32.xlu0 %v500, 17
      %v508 = vpop.permute.xlu0 %507
      %509 = vrot.lane.b32.xlu0 %v499, 17
      %v510 = vpop.permute.xlu0 %509
      %511 = vrot.lane.b32.xlu0 %v501, 17
      %v512 = vpop.permute.xlu0 %511
      %v513 = vlaneseq
      %v514 = vand.u32 %v513, 127
      %vm515 = vcmp.lt.s32.totalorder %v514, 17
      %v516 = vsel %vm515, %v506, %v510
      %v517 = vsel %vm515, %v508, %v512
      %v518 = vsel %vm515, %v510, %v506
      %v519 = vsel %vm515, %v512, %v508
      %v521 = vlaneseq
      %v522 = vshrl.u32 %v521, 7
      %v523 = vsub.s32 0, %v522
      %v524 = vrot.slane %v502, %v523
      %v525 = vlaneseq
      %v526 = vshrl.u32 %v525, 7
      %v527 = vsub.s32 4, %v526
      %v528 = vrot.slane %v502, %v527
      %v531 = vlaneseq
      %v532 = vshrl.u32 %v531, 7
      %v533 = vsub.s32 0, %v532
      %v534 = vrot.slane %v524, %v533
      %v535 = vlaneseq
      %v536 = vshrl.u32 %v535, 7
      %v537 = vsub.s32 0, %v536
      %v538 = vrot.slane %v528, %v537
      %v539 = vmul.f32 %v518, %v534
      %v540 = vmul.f32 %v516, %v538
      %v541 = vmul.f32 %v519, %v534
      %v542 = vmul.f32 %v517, %v538
      %v543 = vlaneseq
      %v544 = vshrl.u32 %v543, 7
      %v545 = vsub.s32 2, %v544
      %v546 = vrot.slane %v502, %v545
      %v547 = vlaneseq
      %v548 = vshrl.u32 %v547, 7
      %v549 = vsub.s32 6, %v548
      %v550 = vrot.slane %v502, %v549
      %v553 = vlaneseq
      %v554 = vshrl.u32 %v553, 7
      %v555 = vsub.s32 2, %v554
      %v556 = vrot.slane %v546, %v555
      %v557 = vlaneseq
      %v558 = vshrl.u32 %v557, 7
      %v559 = vsub.s32 2, %v558
      %v560 = vrot.slane %v550, %v559
      %v561 = vmul.f32 %v539, %v556
      %v562 = vmul.f32 %v540, %v560
      %v563 = vmul.f32 %v541, %v556
      %v564 = vmul.f32 %v542, %v560
      %566 = vset.pattern.permute.xlu0 0
      %567 = vperm.xlu0 %566, %v503
      %v568 = vpop.permute.xlu0 %567
      %571 = vset.pattern.permute.xlu0 0
      %572 = vperm.xlu0 %571, %v504
      %v573 = vpop.permute.xlu0 %572
      %v575 = vmul.f32 %v561, %v568
      %v576 = vmul.f32 %v562, %v568
      %v577 = vmul.f32 %v563, %v573
      %v578 = vmul.f32 %v564, %v573
      %v579 = vadd.f32 %v575, 0.0
      %v580 = vadd.f32 %v576, 0.0
      %v581 = vadd.f32 %v577, 0.0
      %v582 = vadd.f32 %v578, 0.0
      %583 = vrot.lane.b32.xlu0 %v498, 16
      %v584 = vpop.permute.xlu0 %583
      %585 = vrot.lane.b32.xlu0 %v500, 16
      %v586 = vpop.permute.xlu0 %585
      %587 = vrot.lane.b32.xlu0 %v499, 16
      %v588 = vpop.permute.xlu0 %587
      %589 = vrot.lane.b32.xlu0 %v501, 16
      %v590 = vpop.permute.xlu0 %589
      %vm591 = vcmp.lt.s32.totalorder %v514, 16
      %v592 = vsel %vm591, %v584, %v588
      %v593 = vsel %vm591, %v586, %v590
      %v594 = vsel %vm591, %v588, %v584
      %v595 = vsel %vm591, %v590, %v586
      %v596 = vmul.f32 %v594, %v534
      %v597 = vmul.f32 %v592, %v538
      %v598 = vmul.f32 %v595, %v534
      %v599 = vmul.f32 %v593, %v538
      %600 = vset.pattern.permute.xlu0 1
      %601 = vperm.xlu0 %600, %v503
      %v602 = vpop.permute.xlu0 %601
      %604 = vset.pattern.permute.xlu0 1
      %605 = vperm.xlu0 %604, %v504
      %v606 = vpop.permute.xlu0 %605
      %v608 = vmul.f32 %v596, %v602
      %v609 = vmul.f32 %v597, %v602
      %v610 = vmul.f32 %v598, %v606
      %v611 = vmul.f32 %v599, %v606
      %v612 = vadd.f32 %v579, %v608
      %v613 = vadd.f32 %v580, %v609
      %v614 = vadd.f32 %v581, %v610
      %v615 = vadd.f32 %v582, %v611
      %616 = vrot.lane.b32.xlu0 %v498, 15
      %v617 = vpop.permute.xlu0 %616
      %618 = vrot.lane.b32.xlu0 %v500, 15
      %v619 = vpop.permute.xlu0 %618
      %620 = vrot.lane.b32.xlu0 %v499, 15
      %v621 = vpop.permute.xlu0 %620
      %622 = vrot.lane.b32.xlu0 %v501, 15
      %v623 = vpop.permute.xlu0 %622
      %vm624 = vcmp.lt.s32.totalorder %v514, 15
      %v625 = vsel %vm624, %v617, %v621
      %v626 = vsel %vm624, %v619, %v623
      %v627 = vsel %vm624, %v621, %v617
      %v628 = vsel %vm624, %v623, %v619
      %v629 = vmul.f32 %v627, %v534
      %v630 = vmul.f32 %v625, %v538
      %v631 = vmul.f32 %v628, %v534
      %v632 = vmul.f32 %v626, %v538
      %v633 = vlaneseq
      %v634 = vshrl.u32 %v633, 7
      %v635 = vsub.s32 3, %v634
      %v636 = vrot.slane %v502, %v635
      %v637 = vlaneseq
      %v638 = vshrl.u32 %v637, 7
      %v639 = vsub.s32 7, %v638
      %v640 = vrot.slane %v502, %v639
      %v643 = vlaneseq
      %v644 = vshrl.u32 %v643, 7
      %v645 = vsub.s32 3, %v644
      %v646 = vrot.slane %v636, %v645
      %v647 = vlaneseq
      %v648 = vshrl.u32 %v647, 7
      %v649 = vsub.s32 3, %v648
      %v650 = vrot.slane %v640, %v649
      %v651 = vmul.f32 %v629, %v646
      %v652 = vmul.f32 %v630, %v650
      %v653 = vmul.f32 %v631, %v646
      %v654 = vmul.f32 %v632, %v650
      %655 = vset.pattern.permute.xlu0 2
      %656 = vperm.xlu0 %655, %v503
      %v657 = vpop.permute.xlu0 %656
      %659 = vset.pattern.permute.xlu0 2
      %660 = vperm.xlu0 %659, %v504
      %v661 = vpop.permute.xlu0 %660
      %v663 = vmul.f32 %v651, %v657
      %v664 = vmul.f32 %v652, %v657
      %v665 = vmul.f32 %v653, %v661
      %v666 = vmul.f32 %v654, %v661
      %v667 = vadd.f32 %v612, %v663
      %v668 = vadd.f32 %v613, %v664
      %v669 = vadd.f32 %v614, %v665
      %v670 = vadd.f32 %v615, %v666
      %671 = vrot.lane.b32.xlu0 %v498, 1
      %v672 = vpop.permute.xlu0 %671
      %673 = vrot.lane.b32.xlu0 %v500, 1
      %v674 = vpop.permute.xlu0 %673
      %675 = vrot.lane.b32.xlu0 %v499, 1
      %v676 = vpop.permute.xlu0 %675
      %677 = vrot.lane.b32.xlu0 %v501, 1
      %v678 = vpop.permute.xlu0 %677
      %vm679 = vcmp.lt.s32.totalorder %v514, 1
      %v680 = vsel %vm679, %v672, %v676
      %v681 = vsel %vm679, %v674, %v678
      %v682 = vsel %vm679, %v676, %v672
      %v683 = vsel %vm679, %v678, %v674
      %v684 = vmul.f32 %v682, %v556
      %v685 = vmul.f32 %v680, %v560
      %v686 = vmul.f32 %v683, %v556
      %v687 = vmul.f32 %v681, %v560
      %688 = vset.pattern.permute.xlu0 3
      %689 = vperm.xlu0 %688, %v503
      %v690 = vpop.permute.xlu0 %689
      %692 = vset.pattern.permute.xlu0 3
      %693 = vperm.xlu0 %692, %v504
      %v694 = vpop.permute.xlu0 %693
      %v696 = vmul.f32 %v684, %v690
      %v697 = vmul.f32 %v685, %v690
      %v698 = vmul.f32 %v686, %v694
      %v699 = vmul.f32 %v687, %v694
      %v700 = vadd.f32 %v667, %v696
      %v701 = vadd.f32 %v668, %v697
      %v702 = vadd.f32 %v669, %v698
      %v703 = vadd.f32 %v670, %v699
      %704 = vset.pattern.permute.xlu0 4
      %705 = vperm.xlu0 %704, %v503
      %v706 = vpop.permute.xlu0 %705
      %708 = vset.pattern.permute.xlu0 4
      %709 = vperm.xlu0 %708, %v504
      %v710 = vpop.permute.xlu0 %709
      %v712 = vmul.f32 %v498, %v706
      %v713 = vmul.f32 %v499, %v706
      %v714 = vmul.f32 %v500, %v710
      %v715 = vmul.f32 %v501, %v710
      %v716 = vadd.f32 %v700, %v712
      %v717 = vadd.f32 %v701, %v713
      %v718 = vadd.f32 %v702, %v714
      %v719 = vadd.f32 %v703, %v715
      %720 = vrot.lane.b32.xlu0 %v498, 127
      %v721 = vpop.permute.xlu0 %720
      %722 = vrot.lane.b32.xlu0 %v500, 127
      %v723 = vpop.permute.xlu0 %722
      %724 = vrot.lane.b32.xlu0 %v499, 127
      %v725 = vpop.permute.xlu0 %724
      %726 = vrot.lane.b32.xlu0 %v501, 127
      %v727 = vpop.permute.xlu0 %726
      %vm728 = vcmp.lt.s32.totalorder %v514, 127
      %v729 = vsel %vm728, %v721, %v725
      %v730 = vsel %vm728, %v723, %v727
      %v731 = vsel %vm728, %v725, %v721
      %v732 = vsel %vm728, %v727, %v723
      %v733 = vmul.f32 %v729, %v646
      %v734 = vmul.f32 %v731, %v650
      %v735 = vmul.f32 %v730, %v646
      %v736 = vmul.f32 %v732, %v650
      %737 = vset.pattern.permute.xlu0 5
      %738 = vperm.xlu0 %737, %v503
      %v739 = vpop.permute.xlu0 %738
      %741 = vset.pattern.permute.xlu0 5
      %742 = vperm.xlu0 %741, %v504
      %v743 = vpop.permute.xlu0 %742
      %v745 = vmul.f32 %v733, %v739
      %v746 = vmul.f32 %v734, %v739
      %v747 = vmul.f32 %v735, %v743
      %v748 = vmul.f32 %v736, %v743
      %v749 = vadd.f32 %v716, %v745
      %v750 = vadd.f32 %v717, %v746
      %v751 = vadd.f32 %v718, %v747
      %v752 = vadd.f32 %v719, %v748
      %753 = vrot.lane.b32.xlu0 %v498, 113
      %v754 = vpop.permute.xlu0 %753
      %755 = vrot.lane.b32.xlu0 %v500, 113
      %v756 = vpop.permute.xlu0 %755
      %757 = vrot.lane.b32.xlu0 %v499, 113
      %v758 = vpop.permute.xlu0 %757
      %759 = vrot.lane.b32.xlu0 %v501, 113
      %v760 = vpop.permute.xlu0 %759
      %vm761 = vcmp.lt.s32.totalorder %v514, 113
      %v762 = vsel %vm761, %v754, %v758
      %v763 = vsel %vm761, %v756, %v760
      %v764 = vsel %vm761, %v758, %v754
      %v765 = vsel %vm761, %v760, %v756
      %v766 = vlaneseq
      %v767 = vshrl.u32 %v766, 7
      %v768 = vsub.s32 1, %v767
      %v769 = vrot.slane %v502, %v768
      %v770 = vlaneseq
      %v771 = vshrl.u32 %v770, 7
      %v772 = vsub.s32 5, %v771
      %v773 = vrot.slane %v502, %v772
      %v776 = vlaneseq
      %v777 = vshrl.u32 %v776, 7
      %v778 = vsub.s32 1, %v777
      %v779 = vrot.slane %v769, %v778
      %v780 = vlaneseq
      %v781 = vshrl.u32 %v780, 7
      %v782 = vsub.s32 1, %v781
      %v783 = vrot.slane %v773, %v782
      %v784 = vmul.f32 %v762, %v779
      %v785 = vmul.f32 %v764, %v783
      %v786 = vmul.f32 %v763, %v779
      %v787 = vmul.f32 %v765, %v783
      %v788 = vmul.f32 %v784, %v556
      %v789 = vmul.f32 %v785, %v560
      %v790 = vmul.f32 %v786, %v556
      %v791 = vmul.f32 %v787, %v560
      %792 = vset.pattern.permute.xlu0 6
      %793 = vperm.xlu0 %792, %v503
      %v794 = vpop.permute.xlu0 %793
      %796 = vset.pattern.permute.xlu0 6
      %797 = vperm.xlu0 %796, %v504
      %v798 = vpop.permute.xlu0 %797
      %v800 = vmul.f32 %v788, %v794
      %v801 = vmul.f32 %v789, %v794
      %v802 = vmul.f32 %v790, %v798
      %v803 = vmul.f32 %v791, %v798
      %v804 = vadd.f32 %v749, %v800
      %v805 = vadd.f32 %v750, %v801
      %v806 = vadd.f32 %v751, %v802
      %v807 = vadd.f32 %v752, %v803
      %808 = vrot.lane.b32.xlu0 %v498, 112
      %v809 = vpop.permute.xlu0 %808
      %810 = vrot.lane.b32.xlu0 %v500, 112
      %v811 = vpop.permute.xlu0 %810
      %812 = vrot.lane.b32.xlu0 %v499, 112
      %v813 = vpop.permute.xlu0 %812
      %814 = vrot.lane.b32.xlu0 %v501, 112
      %v815 = vpop.permute.xlu0 %814
      %vm816 = vcmp.lt.s32.totalorder %v514, 112
      %v817 = vsel %vm816, %v809, %v813
      %v818 = vsel %vm816, %v811, %v815
      %v819 = vsel %vm816, %v813, %v809
      %v820 = vsel %vm816, %v815, %v811
      %v821 = vmul.f32 %v817, %v779
      %v822 = vmul.f32 %v819, %v783
      %v823 = vmul.f32 %v818, %v779
      %v824 = vmul.f32 %v820, %v783
      %825 = vset.pattern.permute.xlu0 7
      %826 = vperm.xlu0 %825, %v503
      %v827 = vpop.permute.xlu0 %826
      %829 = vset.pattern.permute.xlu0 7
      %830 = vperm.xlu0 %829, %v504
      %v831 = vpop.permute.xlu0 %830
      %v833 = vmul.f32 %v821, %v827
      %v834 = vmul.f32 %v822, %v827
      %v835 = vmul.f32 %v823, %v831
      %v836 = vmul.f32 %v824, %v831
      %v837 = vadd.f32 %v804, %v833
      %v838 = vadd.f32 %v805, %v834
      %v839 = vadd.f32 %v806, %v835
      %v840 = vadd.f32 %v807, %v836
      %841 = vrot.lane.b32.xlu0 %v498, 111
      %v842 = vpop.permute.xlu0 %841
      %843 = vrot.lane.b32.xlu0 %v500, 111
      %v844 = vpop.permute.xlu0 %843
      %845 = vrot.lane.b32.xlu0 %v499, 111
      %v846 = vpop.permute.xlu0 %845
      %847 = vrot.lane.b32.xlu0 %v501, 111
      %v848 = vpop.permute.xlu0 %847
      %vm849 = vcmp.lt.s32.totalorder %v514, 111
      %v850 = vsel %vm849, %v842, %v846
      %v851 = vsel %vm849, %v844, %v848
      %v852 = vsel %vm849, %v846, %v842
      %v853 = vsel %vm849, %v848, %v844
      %v854 = vmul.f32 %v850, %v779
      %v855 = vmul.f32 %v852, %v783
      %v856 = vmul.f32 %v851, %v779
      %v857 = vmul.f32 %v853, %v783
      %v858 = vmul.f32 %v854, %v646
      %v859 = vmul.f32 %v855, %v650
      %v860 = vmul.f32 %v856, %v646
      %v861 = vmul.f32 %v857, %v650
      %862 = vset.pattern.permute.xlu0 8
      %863 = vperm.xlu0 %862, %v503
      %v864 = vpop.permute.xlu0 %863
      %866 = vset.pattern.permute.xlu0 8
      %867 = vperm.xlu0 %866, %v504
      %v868 = vpop.permute.xlu0 %867
      %v870 = vmul.f32 %v858, %v864
      %v871 = vmul.f32 %v859, %v864
      %v872 = vmul.f32 %v860, %v868
      %v873 = vmul.f32 %v861, %v868
      %v874 = vadd.f32 %v837, %v870
      %v875 = vadd.f32 %v838, %v871
      %v876 = vadd.f32 %v839, %v872
      %v877 = vadd.f32 %v840, %v873
      %v878 = vld [vmem:[%s5] sm:$0xff]
      %v879 = vld [vmem:[%s5 + $0x8] sm:$0xff]
      %881 = vset.pattern.permute.xlu0 0
      %882 = vperm.xlu0 %881, %v878
      %v883 = vpop.permute.xlu0 %882
      %886 = vset.pattern.permute.xlu0 0
      %887 = vperm.xlu0 %886, %v879
      %v888 = vpop.permute.xlu0 %887
      %v890 = vadd.f32 %v874, %v883
      %v891 = vadd.f32 %v875, %v883
      %v892 = vadd.f32 %v876, %v888
      %v893 = vadd.f32 %v877, %v888
      %v894 = vmax.f32 %v890, 0.0
      %v895 = vmax.f32 %v891, 0.0
      %v896 = vmax.f32 %v892, 0.0
      %v897 = vmax.f32 %v893, 0.0
      %v898 = vmin.f32 %v894, 6.0
      %v899 = vmin.f32 %v895, 6.0
      %v900 = vmin.f32 %v896, 6.0
      %v901 = vmin.f32 %v897, 6.0
      %v902 = vadd.f32 %v898, %v899
      %903 = vadd.xlane.f32.xlu0 %v902
      %v904 = vpop.xlane.xlu0 %903
      %v905 = vadd.f32 %v900, %v901
      %906 = vadd.xlane.f32.xlu0 %v905
      %v907 = vpop.xlane.xlu0 %906
      %v908 = vrcp.pop 256.0
      %v909 = vmul.f32 %v904, %v908
      %v910 = vmul.f32 %v907, %v908
      %v911 = vld [vmem:[%s6] sm:$0x3]
      %v912 = vpack.c.bf16 %v910, %v909
      %v913 = vld [vmem:[%s7] sm:$0xf]
      %vm914 = vcmask 130048
      %v916 = vsel %vm914, %v911, 0
      %918 = vmatprep.subr.bf16.mxu0 0
      %919 = vmatpush1.bf16.msra.mxu0 0
      %920 = vmatprep.subr.bf16.mxu0 0
      %921 = vmatpush1.bf16.msra.mxu0 0
      %922 = vmatprep.subr.bf16.mxu0 0
      %923 = vmatpush1.bf16.msra.mxu0 0
      %924 = vmatprep.subr.bf16.mxu0 0
      %925 = vmatpush1.bf16.msra.mxu0 0
      %926 = vmatprep.subr.bf16.mxu0 0
      %927 = vmatpush1.bf16.msra.mxu0 0
      %928 = vmatprep.subr.bf16.mxu0 0
      %929 = vmatpush1.bf16.msra.mxu0 0
      %930 = vmatprep.subr.bf16.mxu0 0
      %931 = vmatpush1.bf16.msra.mxu0 0
      %932 = vmatprep.subr.bf16.mxu0 0
      %933 = vmatpush1.bf16.msra.mxu0 %v912
      %934 = vmatprep.subr.bf16.mxu0 0
      %935 = vmatpush2.bf16.msra.mxu0 0
      %936 = vmatprep.subr.bf16.mxu0 0
      %937 = vmatpush2.bf16.msra.mxu0 0
      %938 = vmatprep.subr.bf16.mxu0 0
      %939 = vmatpush2.bf16.msra.mxu0 0
      %940 = vmatprep.subr.bf16.mxu0 0
      %941 = vmatpush2.bf16.msra.mxu0 0
      %942 = vmatprep.subr.bf16.mxu0 0
      %943 = vmatpush2.bf16.msra.mxu0 0
      %944 = vmatprep.subr.bf16.mxu0 0
      %945 = vmatpush2.bf16.msra.mxu0 0
      %946 = vmatprep.subr.bf16.mxu0 0
      %947 = vmatpush2.bf16.msra.mxu0 0
      %948 = vmatprep.subr.bf16.mxu0 0
      %949 = vmatpush2.bf16.msra.mxu0 0
      %950 = vmatprep.mubr.bf16.mxu0 0
      %951 = vmatmul.mubr.bf16.gmra.mxu0 %v916
      %v952 = vpop.f32.mrf.mxu0
      %v953 = vadd.f32 %v913, %v952
      %v954 = vpop.f32.mrf.mxu0
      %v955 = vpop.f32.mrf.mxu0
      %v956 = vpop.f32.mrf.mxu0
      %957 = vdwg.mxu0
      %v958 = vmax.f32 %v953, 0.0
      %v959 = vld [vmem:[%s8] sm:$0xf]
      %v960 = vld [vmem:[%s8 + $0x4] sm:$0xf]
      %v961 = vpack.c.bf16 %v958, %v958
      %v962 = vld [vmem:[%s9] sm:$0xff]
      %v963 = vld [vmem:[%s9 + $0x8] sm:$0xff]
      %v966 = vunpack.c.l.b16 %v959
      %v967 = vunpack.c.l.b16 %v960
      %v968 = vpack.c.b16 %v967, %v966
      %v970 = vsel %vm440, %v968, 0
      %v973 = vsel %vm444, %v961, 0
      %975 = vmatprep.subr.bf16.mxu0 0
      %976 = vmatpush1.bf16.msra.mxu0 0
      %977 = vmatprep.subr.bf16.mxu0 0
      %978 = vmatpush1.bf16.msra.mxu0 0
      %979 = vmatprep.subr.bf16.mxu0 0
      %980 = vmatpush1.bf16.msra.mxu0 0
      %981 = vmatprep.subr.bf16.mxu0 0
      %982 = vmatpush1.bf16.msra.mxu0 0
      %983 = vmatprep.subr.bf16.mxu0 0
      %984 = vmatpush1.bf16.msra.mxu0 0
      %985 = vmatprep.subr.bf16.mxu0 0
      %986 = vmatpush1.bf16.msra.mxu0 0
      %987 = vmatprep.subr.bf16.mxu0 0
      %988 = vmatpush1.bf16.msra.mxu0 0
      %989 = vmatprep.subr.bf16.mxu0 0
      %990 = vmatpush1.bf16.msra.mxu0 %v973
      %991 = vmatprep.subr.bf16.mxu0 0
      %992 = vmatpush2.bf16.msra.mxu0 0
      %993 = vmatprep.subr.bf16.mxu0 0
      %994 = vmatpush2.bf16.msra.mxu0 0
      %995 = vmatprep.subr.bf16.mxu0 0
      %996 = vmatpush2.bf16.msra.mxu0 0
      %997 = vmatprep.subr.bf16.mxu0 0
      %998 = vmatpush2.bf16.msra.mxu0 0
      %999 = vmatprep.subr.bf16.mxu0 0
      %1000 = vmatpush2.bf16.msra.mxu0 0
      %1001 = vmatprep.subr.bf16.mxu0 0
      %1002 = vmatpush2.bf16.msra.mxu0 0
      %1003 = vmatprep.subr.bf16.mxu0 0
      %1004 = vmatpush2.bf16.msra.mxu0 0
      %1005 = vmatprep.subr.bf16.mxu0 0
      %1006 = vmatpush2.bf16.msra.mxu0 0
      %1007 = vmatprep.mubr.bf16.mxu0 0
      %1008 = vmatmul.mubr.bf16.gmra.mxu0 %v970
      %v1009 = vpop.f32.mrf.mxu0
      %v1010 = vadd.f32 %v962, %v1009
      %v1011 = vpop.f32.mrf.mxu0
      %v1012 = vpop.f32.mrf.mxu0
      %v1013 = vadd.f32 %v963, %v1012
      %v1014 = vpop.f32.mrf.mxu0
      %1015 = vdwg.mxu0
      %v1016 = vxor.u32 %v1010, 2147483648
      %v1017 = vxor.u32 %v1013, 2147483648
      %v1018 = vmul.f32 %v1016, 1.442695
      %v1019 = vpow.pop %v1018
      %v1020 = vmul.f32 %v1017, 1.442695
      %v1021 = vpow.pop %v1020
      %v1022 = vadd.f32 %v1019, 1.0
      %v1023 = vadd.f32 %v1021, 1.0
      %v1024 = vrcp.pop %v1022
      %v1025 = vmul.f32 1.0, %v1024
      %v1026 = vrcp.pop %v1023
      %v1027 = vmul.f32 1.0, %v1026
      %1029 = vset.pattern.permute.xlu0 0
      %1030 = vperm.xlu0 %1029, %v1025
      %v1031 = vpop.permute.xlu0 %1030
      %1034 = vset.pattern.permute.xlu0 0
      %1035 = vperm.xlu0 %1034, %v1027
      %v1036 = vpop.permute.xlu0 %1035
      %v1038 = vmul.f32 %v898, %v1031
      %v1039 = vmul.f32 %v899, %v1031
      %v1040 = vmul.f32 %v900, %v1036
      %v1041 = vmul.f32 %v901, %v1036
      %v1042 = vpack.c.bf16 %v1040, %v1038
      %v1043 = vpack.c.bf16 %v1041, %v1039
      %v1044 = vld [vmem:[%s10] sm:$0x3]
      %v1045 = vld [vmem:[%s11] sm:$0xf]
      %1047 = vset.pattern.permute.xlu0 0
      %1048 = vperm.xlu0 %1047, %v1045
      %v1049 = vpop.permute.xlu0 %1048
      %v1052 = vsel %vm914, %v1044, 0
      %1054 = vmatprep.subr.bf16.mxu0 0
      %1055 = vmatpush1.bf16.msra.mxu0 0
      %1056 = vmatprep.subr.bf16.mxu0 0
      %1057 = vmatpush1.bf16.msra.mxu0 0
      %1058 = vmatprep.subr.bf16.mxu0 0
      %1059 = vmatpush1.bf16.msra.mxu0 0
      %1060 = vmatprep.subr.bf16.mxu0 0
      %1061 = vmatpush1.bf16.msra.mxu0 0
      %1062 = vmatprep.subr.bf16.mxu0 0
      %1063 = vmatpush1.bf16.msra.mxu0 0
      %1064 = vmatprep.subr.bf16.mxu0 0
      %1065 = vmatpush1.bf16.msra.mxu0 0
      %1066 = vmatprep.subr.bf16.mxu0 0
      %1067 = vmatpush1.bf16.msra.mxu0 0
      %1068 = vmatprep.subr.bf16.mxu0 %v1043
      %1069 = vmatpush1.bf16.msra.mxu0 %v1042
      %1070 = vmatprep.subr.bf16.mxu0 0
      %1071 = vmatpush2.bf16.msra.mxu0 0
      %1072 = vmatprep.subr.bf16.mxu0 0
      %1073 = vmatpush2.bf16.msra.mxu0 0
      %1074 = vmatprep.subr.bf16.mxu0 0
      %1075 = vmatpush2.bf16.msra.mxu0 0
      %1076 = vmatprep.subr.bf16.mxu0 0
      %1077 = vmatpush2.bf16.msra.mxu0 0
      %1078 = vmatprep.subr.bf16.mxu0 0
      %1079 = vmatpush2.bf16.msra.mxu0 0
      %1080 = vmatprep.subr.bf16.mxu0 0
      %1081 = vmatpush2.bf16.msra.mxu0 0
      %1082 = vmatprep.subr.bf16.mxu0 0
      %1083 = vmatpush2.bf16.msra.mxu0 0
      %1084 = vmatprep.subr.bf16.mxu0 0
      %1085 = vmatpush2.bf16.msra.mxu0 0
      %1086 = vmatprep.mubr.bf16.mxu0 0
      %1087 = vmatmul.mubr.bf16.gmra.mxu0 %v1052
      %v1088 = vpop.f32.mrf.mxu0
      %v1089 = vadd.f32 %v1049, %v1088
      %v1090 = vpop.f32.mrf.mxu0
      %v1091 = vadd.f32 %v1049, %v1090
      %v1092 = vpop.f32.mrf.mxu0
      %v1093 = vpop.f32.mrf.mxu0
      %1094 = vdwg.mxu0
      %v1095 = vadd.f32 %v1089, %v415
      %v1096 = vadd.f32 %v1091, %v419
      %v1099 = vcombine.low %v1095, %v1096
      %1101 = vst [vmem:[%s413] sm:$0xff] %v1099
      %p1102 = scmp.lt.s32.totalorder %s23, 1
      %s1103 = scalar_select %p1102, %s23, 1
      %s1104 = smul.addr %s1103, 2
      %s1105 = smul.addr %s1104, 4
      %s1106 = scalar_lea.vmem %s12, %s1105
      // Predicated region
      $region69: #{base_op_forward.1} parent=67 // pred_check
        %p1107 = pneg %p298
      $region70: #{base_op_forward.1} parent=67 // pred_check_branch
        %1109 = sbr.rel (%p1107) target = $region72
      $region71: #{base_op_forward.1} parent=67 // pred_region
        _
      $region72: #{base_op_forward.1} parent=67 // pred_fallthru
        _
    $region68: #{base_op_forward.1} parent=5 // pred_fallthru
      _
    %p1110 = scmp.le.s32.totalorder 2, %s18
    // Predicated region
    $region73: #{base_op_forward.1} parent=5 // pred_check
      %p1111 = pneg %p1110
    $region74: #{base_op_forward.1} parent=5 // pred_check_branch
      %1113 = sbr.rel (%p1111) target = $region76
    $region75: #{base_op_forward.1} parent=5 // pred_region
      %s1114 = ssub.s32 %s18, 2
      // Predicated region
      $region77: #{base_op_forward.1} parent=75 // pred_check
        %p1115 = pneg %p304
      $region78: #{base_op_forward.1} parent=75 // pred_check_branch
        %1117 = sbr.rel (%p1115) target = $region80
      $region79: #{base_op_forward.1} parent=75 // pred_region
        %p1118 = scmp.lt.s32.totalorder %s24, 1
        %s1119 = scalar_select %p1118, %s24, 1
        %s1120 = smul.addr %s1119, 2
        %s1121 = smul.addr %s1120, 4
        %s1122 = scalar_lea.vmem %s12, %s1121
      $region80: #{base_op_forward.1} parent=75 // pred_fallthru
        _
    $region76: #{base_op_forward.1} parent=5 // pred_fallthru
      _
  $region6: #{base_op_forward.1} parent=0 // loop_footer
    %s22 = sadd.s32 1, %s18
  $region7: #{base_op_forward.1} parent=0 // loop_footer_branch
    %17 = sbr.rel target = $region3
  $region8: #{base_op_forward.1} parent=0 // loop_exit
    _

</llo_original>
